<compile_context>
chip_gen: v6e
topology: v6e:2x2x1
jax: 0.10.0
libtpu: 0.0.40
codegen_flags: <defaults>
</compile_context>

<pallas_src>
import functools

import numpy as np
import jax
import jax.numpy as jnp
from jax import lax
from jax.experimental import pallas as pl
from jax.experimental.pallas import tpu as pltpu

SELU_ALPHA = 1.6732632423543772848170429916717
SELU_SCALE = 1.0507009873554804934193349852946
BN_EPS = 1e-5
_VMEM_LIMIT = 48 * 1024 * 1024


def _round_up(v, m):
    return ((v + m - 1) // m) * m


def _pick_tm(m):
    """Largest row tile <= 256 that divides M (>=2 parallel tiles at M>=512)."""
    for t in (256, 128, 64, 32, 16, 8):
        if m >= t and m % t == 0:
            return t
    return _round_up(max(m, 1), 8)


def _k_limit(m):
    if m <= 16:
        return 8192
    if m <= 64:
        return 4096
    return 1024


def _pick_k(k, m):
    """Returns (Kp, tk).  Small K (relative to M) stays one full-width step."""
    limit = _k_limit(m)
    if k <= limit:
        return k, k
    for t in (512, 256, 128):
        if k % t == 0:
            return k, t
    return _round_up(k, 256), 256


def _pick_n(n, m):
    """Returns (Np, tn).  Fat N tiles when M is tiny; narrow heads pad to 128."""
    if m <= 64 and n % 512 == 0:
        return n, 512
    if n % 256 == 0:
        return n, 256
    if n % 128 == 0:
        return n, 128
    return _round_up(n, 128), 128


def _act(x, kind):
    if kind == "none":
        return x
    if kind == "relu":
        return jnp.maximum(x, 0.0)
    if kind == "selu":
        neg = SELU_ALPHA * (jnp.exp(jnp.minimum(x, 0.0)) - 1.0)
        return SELU_SCALE * jnp.where(x > 0.0, x, neg)
    raise ValueError(kind)


# ----------------------------- Pallas kernels -------------------------------

def _mm_bias_kernel(a_ref, b_ref, bias_ref, o_ref, *, act):
    # Single-K fast path: no accumulator scratch, no pl.when.
    y = jnp.dot(a_ref[...], b_ref[...], preferred_element_type=jnp.float32)
    o_ref[...] = _act(y + bias_ref[...], act).astype(o_ref.dtype)


def _mm_bias_acc_kernel(a_ref, b_ref, bias_ref, o_ref, acc_ref, *, act):
    # Generic K-tiled fallback (not hit at these shapes: every call has gk==1).
    # Grid-position queries stay at the kernel top level (never inside pl.when
    # bodies), which is what broke the previous version in interpret mode.
    k = pl.program_id(2)
    nk = pl.num_programs(2)

    @pl.when(k == 0)
    def _():
        acc_ref[...] = jnp.zeros_like(acc_ref)

    acc_ref[...] += jnp.dot(a_ref[...], b_ref[...],
                            preferred_element_type=jnp.float32)

    @pl.when(k == nk - 1)
    def _():
        o_ref[...] = _act(acc_ref[...] + bias_ref[...], act).astype(o_ref.dtype)


def _bn_epilogue(y, g, bt, m_valid, eps):
    """Train-mode BatchNorm over the row axis of one full-M f32 tile."""
    rows = lax.broadcasted_iota(jnp.int32, (y.shape[0], 1), 0)
    mask = rows < m_valid
    inv_m = 1.0 / float(m_valid)
    mean = jnp.sum(jnp.where(mask, y, 0.0), axis=0, keepdims=True) * inv_m
    cent = jnp.where(mask, y - mean, 0.0)
    var = jnp.sum(cent * cent, axis=0, keepdims=True) * inv_m
    scale = g * lax.rsqrt(var + eps)
    shift = bt - mean * scale
    return y * scale + shift


def _mm_bn_kernel(a_ref, b_ref, g_ref, bt_ref, o_ref, *, act, m_valid, eps):
    y = jnp.dot(a_ref[...], b_ref[...], preferred_element_type=jnp.float32)
    y = _bn_epilogue(y, g_ref[...], bt_ref[...], m_valid, eps)
    o_ref[...] = _act(y, act).astype(o_ref.dtype)


def _mm_bn_res_kernel(a_ref, b_ref, g_ref, bt_ref, r_ref, o_ref, *,
                      act, m_valid, eps):
    y = jnp.dot(a_ref[...], b_ref[...], preferred_element_type=jnp.float32)
    y = _bn_epilogue(y, g_ref[...], bt_ref[...], m_valid, eps)
    y = y + r_ref[...].astype(jnp.float32)
    o_ref[...] = _act(y, act).astype(o_ref.dtype)


def _maxpool_kernel(p_ref, o_ref):
    m = p_ref[:, 0, :]
    for t in range(1, 9):
        m = jnp.maximum(m, p_ref[:, t, :])
    o_ref[...] = m.astype(o_ref.dtype)


# ----------------------------- kernel wrappers -------------------------------

@functools.partial(jax.jit, static_argnames=("act", "out_dtype"))
def matmul_bias_act(a, b, bias, *, act="none", out_dtype=jnp.bfloat16):
    """act((a @ b) + bias): bf16 MXU operands, f32 accumulate + f32 epilogue,
    bf16 (default) output to halve activation HBM write traffic."""
    M, K = a.shape
    _, N = b.shape
    tm = _pick_tm(M)
    Mp = _round_up(M, tm)
    Kp, tk = _pick_k(K, M)
    Np, tn = _pick_n(N, M)

    a16 = a.astype(jnp.bfloat16)
    b16 = b.astype(jnp.bfloat16)
    bias2 = jnp.asarray(bias, jnp.float32).reshape(1, N)
    if Mp != M:
        a16 = jnp.pad(a16, ((0, Mp - M), (0, 0)))
    if Kp != K:
        a16 = jnp.pad(a16, ((0, 0), (0, Kp - K)))
        b16 = jnp.pad(b16, ((0, Kp - K), (0, 0)))
    if Np != N:
        b16 = jnp.pad(b16, ((0, 0), (0, Np - N)))
        bias2 = jnp.pad(bias2, ((0, 0), (0, Np - N)))

    gm, gn, gk = Mp // tm, Np // tn, Kp // tk
    if gk == 1:
        out = pl.pallas_call(
            functools.partial(_mm_bias_kernel, act=act),
            out_shape=jax.ShapeDtypeStruct((Mp, Np), out_dtype),
            grid=(gm, gn),
            in_specs=[pl.BlockSpec((tm, Kp), lambda i, j: (i, 0)),
                      pl.BlockSpec((Kp, tn), lambda i, j: (0, j)),
                      pl.BlockSpec((1, tn), lambda i, j: (0, j))],
            out_specs=pl.BlockSpec((tm, tn), lambda i, j: (i, j)),
            compiler_params=pltpu.CompilerParams(
                dimension_semantics=("parallel", "parallel"),
                vmem_limit_bytes=_VMEM_LIMIT),
        )(a16, b16, bias2)
    else:
        out = pl.pallas_call(
            functools.partial(_mm_bias_acc_kernel, act=act),
            out_shape=jax.ShapeDtypeStruct((Mp, Np), out_dtype),
            grid=(gm, gn, gk),
            in_specs=[pl.BlockSpec((tm, tk), lambda i, j, k: (i, k)),
                      pl.BlockSpec((tk, tn), lambda i, j, k: (k, j)),
                      pl.BlockSpec((1, tn), lambda i, j, k: (0, j))],
            out_specs=pl.BlockSpec((tm, tn), lambda i, j, k: (i, j)),
            scratch_shapes=[pltpu.VMEM((tm, tn), jnp.float32)],
            compiler_params=pltpu.CompilerParams(
                dimension_semantics=("parallel", "parallel", "arbitrary"),
                vmem_limit_bytes=_VMEM_LIMIT),
        )(a16, b16, bias2)
    if Mp != M or Np != N:
        out = out[:M, :N]
    return out


@functools.partial(jax.jit, static_argnames=("act", "has_res", "out_dtype"))
def matmul_bn_act(a, b, gamma, beta, res, *, act, has_res,
                  out_dtype=jnp.bfloat16):
    """act(batchnorm(a @ b) [+ res]): batch mean/var + gamma/beta + residual +
    activation fused into the matmul epilogue (single M tile, single K step)."""
    M, K = a.shape
    _, N = b.shape
    Mp = _round_up(M, 8)
    Np, tn = _pick_n(N, M)
    fused = (Mp <= 1024) and (K <= _k_limit(M))

    if not fused:
        # TODO(synk): not hit at these shapes -- BN stats fall back to XLA over
        # the Pallas conv output instead of the fused epilogue.
        y = matmul_bias_act(a, b, jnp.zeros((N,), jnp.float32),
                            act="none", out_dtype=jnp.float32)
        mean = jnp.mean(y, axis=0)
        var = jnp.mean(jnp.square(y - mean), axis=0)
        out = (y - mean) * (gamma / jnp.sqrt(var + BN_EPS)) + beta
        if has_res:
            out = out + res.astype(jnp.float32)
        return _act(out, act).astype(out_dtype)

    a16 = a.astype(jnp.bfloat16)
    b16 = b.astype(jnp.bfloat16)
    g = jnp.asarray(gamma, jnp.float32).reshape(1, N)
    bt = jnp.asarray(beta, jnp.float32).reshape(1, N)
    if Mp != M:
        a16 = jnp.pad(a16, ((0, Mp - M), (0, 0)))
    if Np != N:
        b16 = jnp.pad(b16, ((0, 0), (0, Np - N)))
        g = jnp.pad(g, ((0, 0), (0, Np - N)))
        bt = jnp.pad(bt, ((0, 0), (0, Np - N)))

    in_specs = [pl.BlockSpec((Mp, K), lambda j: (0, 0)),
                pl.BlockSpec((K, tn), lambda j: (0, j)),
                pl.BlockSpec((1, tn), lambda j: (0, j)),
                pl.BlockSpec((1, tn), lambda j: (0, j))]
    args = [a16, b16, g, bt]
    if has_res:
        r16 = res.astype(jnp.bfloat16)
        if Mp != M or Np != N:
            r16 = jnp.pad(r16, ((0, Mp - M), (0, Np - N)))
        in_specs.append(pl.BlockSpec((Mp, tn), lambda j: (0, j)))
        args.append(r16)
        kern = functools.partial(_mm_bn_res_kernel, act=act, m_valid=M,
                                 eps=BN_EPS)
    else:
        kern = functools.partial(_mm_bn_kernel, act=act, m_valid=M, eps=BN_EPS)

    out = pl.pallas_call(
        kern,
        out_shape=jax.ShapeDtypeStruct((Mp, Np), out_dtype),
        grid=(Np // tn,),
        in_specs=in_specs,
        out_specs=pl.BlockSpec((Mp, tn), lambda j: (0, j)),
        compiler_params=pltpu.CompilerParams(
            dimension_semantics=("parallel",),
            vmem_limit_bytes=_VMEM_LIMIT),
    )(*args)
    if Mp != M or Np != N:
        out = out[:M, :N]
    return out


@jax.jit
def maxpool9(p):
    """p: (M, 9, C) window patches -> (M, C) max over the 3x3 window."""
    M, _, C = p.shape
    tm = _pick_tm(M)
    Mp = _round_up(M, tm)
    if Mp != M:
        p = jnp.pad(p, ((0, Mp - M), (0, 0), (0, 0)),
                    constant_values=-jnp.inf)
    out = pl.pallas_call(
        _maxpool_kernel,
        out_shape=jax.ShapeDtypeStruct((Mp, C), p.dtype),
        grid=(Mp // tm,),
        in_specs=[pl.BlockSpec((tm, 9, C), lambda i: (i, 0, 0))],
        out_specs=pl.BlockSpec((tm, C), lambda i: (i, 0)),
        compiler_params=pltpu.CompilerParams(
            dimension_semantics=("parallel",),
            vmem_limit_bytes=_VMEM_LIMIT),
    )(p)
    return out[:M] if Mp != M else out


# ------------------------------ layer helpers --------------------------------

def _im2col(x, w, stride, padding):
    """NHWC -> (rows, taps*Cin) patch matrix + reshaped weights."""
    N, H, W, Cin = x.shape
    KH, KW, _, Cout = w.shape
    if KH == 1 and KW == 1 and padding == 0:
        if stride > 1:
            x = x[:, ::stride, ::stride, :]
        _, Ho, Wo, _ = x.shape
        a = x.reshape(N * Ho * Wo, Cin)
        wm = w.reshape(Cin, Cout)
    else:
        # TODO(synk): im2col patch extraction stays as XLA glue (bf16); the
        # materialized patches are <200 KB at these shapes so fusing the tap
        # loop into the matmul grid would buy almost nothing.
        xp = jnp.pad(x.astype(jnp.bfloat16),
                     ((0, 0), (padding, padding), (padding, padding), (0, 0)))
        Hp, Wp = H + 2 * padding, W + 2 * padding
        Ho = (Hp - KH) // stride + 1
        Wo = (Wp - KW) // stride + 1
        patches = [xp[:, kh:kh + stride * Ho:stride,
                      kw:kw + stride * Wo:stride, :]
                   for kh in range(KH) for kw in range(KW)]
        a = jnp.stack(patches, axis=3).reshape(N * Ho * Wo, KH * KW * Cin)
        wm = w.reshape(KH * KW * Cin, Cout)
    return a, wm, (N, Ho, Wo, Cout)


def conv2d(x, w, b=None, stride=1, padding=0, act="none",
           out_dtype=jnp.bfloat16):
    """NHWC conv via im2col + Pallas matmul (bias + activation in epilogue)."""
    a, wm, (N, Ho, Wo, Cout) = _im2col(x, w, stride, padding)
    bias = b if b is not None else jnp.zeros((Cout,), jnp.float32)
    out = matmul_bias_act(a, wm, bias, act=act, out_dtype=out_dtype)
    return out.reshape(N, Ho, Wo, Cout)


def conv_bn(x, w, gamma, beta, stride=1, padding=0, act="none", residual=None):
    """conv (no bias) -> train-mode BatchNorm2d -> [+residual] -> activation,
    all inside one Pallas matmul call."""
    a, wm, (N, Ho, Wo, Cout) = _im2col(x, w, stride, padding)
    res = (residual.reshape(N * Ho * Wo, Cout)
           if residual is not None else None)
    out = matmul_bn_act(a, wm, gamma, beta, res, act=act,
                        has_res=residual is not None)
    return out.reshape(N, Ho, Wo, Cout)


def maxpool_3x3_s2_p1(x):
    N, H, W, C = x.shape
    xp = jnp.pad(x, ((0, 0), (1, 1), (1, 1), (0, 0)),
                 constant_values=-jnp.inf)
    Ho = (H + 2 - 3) // 2 + 1
    Wo = (W + 2 - 3) // 2 + 1
    patches = [xp[:, kh:kh + 2 * Ho:2, kw:kw + 2 * Wo:2, :]
               for kh in range(3) for kw in range(3)]
    p = jnp.stack(patches, axis=3).reshape(N * Ho * Wo, 9, C)
    return maxpool9(p).reshape(N, Ho, Wo, C)


@functools.lru_cache(maxsize=None)
def _kron_interp_np(h, w):
    """(2h*2w, h*w) align_corners=True bilinear interpolation matrix (numpy)."""
    def interp(n_in, n_out):
        if n_in == 1:
            return np.ones((n_out, 1), np.float32)
        s = np.arange(n_out, dtype=np.float64) * (n_in - 1) / (n_out - 1)
        f = np.clip(np.floor(s).astype(np.int64), 0, n_in - 2)
        t = (s - f).astype(np.float32)
        m = np.zeros((n_out, n_in), np.float32)
        m[np.arange(n_out), f] += 1.0 - t
        m[np.arange(n_out), f + 1] += t
        return m
    return np.kron(interp(h, 2 * h), interp(w, 2 * w)).astype(np.float32)


def upsample2x_bilinear(x):
    """nn.Upsample(scale_factor=2, mode='bilinear', align_corners=True).

    Batched channel-last formulation: one (Ho*Wo, H*W) interpolation matrix
    multiplies the (H*W, N*C) image (batch folded onto the lane axis) in a
    single Pallas matmul; channels stay lane-dense."""
    N, H, W, C = x.shape
    Ho, Wo = 2 * H, 2 * W
    if H == 1 and W == 1:
        return jnp.tile(x, (1, 2, 2, 1))  # align_corners on 1x1 = replicate
    A = jnp.asarray(_kron_interp_np(H, W))           # (Ho*Wo, H*W)
    xr = jnp.transpose(x, (1, 2, 0, 3)).reshape(H * W, N * C)
    zb = jnp.zeros((N * C,), jnp.float32)
    y = matmul_bias_act(A, xr, zb, act="none", out_dtype=jnp.bfloat16)
    return jnp.transpose(y.reshape(Ho, Wo, N, C), (2, 0, 1, 3))


# ------------------------------ parameters -----------------------------------

class ParamGen:
    def __init__(self, key):
        self.key = key

    def _next(self):
        self.key, k = jax.random.split(self.key)
        return k

    def conv(self, kh, kw, cin, cout, bias=True):
        fan_in = kh * kw * cin
        w = jax.random.normal(self._next(), (kh, kw, cin, cout),
                              jnp.float32) / np.sqrt(fan_in)
        b = (0.01 * jax.random.normal(self._next(), (cout,), jnp.float32)
             if bias else None)
        return {"w": w, "b": b}

    def bn(self, c):
        gamma = 1.0 + 0.01 * jax.random.normal(self._next(), (c,), jnp.float32)
        beta = 0.01 * jax.random.normal(self._next(), (c,), jnp.float32)
        return {"gamma": gamma, "beta": beta}


def make_bottleneck_params(pg, inplanes, planes, downsample):
    p = {
        "conv1": pg.conv(1, 1, inplanes, planes, bias=False),
        "bn1": pg.bn(planes),
        "conv2": pg.conv(3, 3, planes, planes, bias=False),
        "bn2": pg.bn(planes),
        "conv3": pg.conv(1, 1, planes, planes * 4, bias=False),
        "bn3": pg.bn(planes * 4),
    }
    if downsample:
        p["down_conv"] = pg.conv(1, 1, inplanes, planes * 4, bias=False)
        p["down_bn"] = pg.bn(planes * 4)
    return p


def make_resnet_layer(pg, inplanes, planes, blocks):
    layer = [make_bottleneck_params(pg, inplanes, planes, True)]
    for _ in range(blocks - 1):
        layer.append(make_bottleneck_params(pg, planes * 4, planes, False))
    return layer


def make_lanes_segnet_params(key):
    # TODO(synk): torchvision resnet50(pretrained=True) weights are replaced by
    # deterministic synthetic initialization (same architecture / shapes).
    pg = ParamGen(key)
    p = {
        "base_conv1": pg.conv(2, 2, 3, 64),
        "base_conv2": pg.conv(1, 1, 64, 128),
        "de_conv1": pg.conv(1, 1, 128, 64),
        "de_conv2": pg.conv(1, 1, 64, 32),
        "de_conv3": pg.conv(1, 1, 32, 3),
    }
    u = {
        "oc1": pg.conv(1, 1, 3, 64),
        "oc2": pg.conv(1, 1, 64, 64),
        "rconv1": pg.conv(7, 7, 3, 64, bias=False),
        "rbn1": pg.bn(64),
        "rlayer1": make_resnet_layer(pg, 64, 64, 3),
        "rlayer2": make_resnet_layer(pg, 256, 128, 4),
        "rlayer3": make_resnet_layer(pg, 512, 256, 6),
        "rlayer4": make_resnet_layer(pg, 1024, 512, 3),
        "layer5_up": pg.conv(1, 1, 2048, 2048),
        "layer4_up": pg.conv(1, 1, 1024, 1024),
        "layer3_up": pg.conv(1, 1, 512, 512),
        "layer2_up": pg.conv(1, 1, 256, 256),
        "layer1_up": pg.conv(1, 1, 64, 64),
        "conv5_up": pg.conv(1, 1, 2048 + 1024, 1024),
        "conv4_up": pg.conv(1, 1, 1024 + 512, 512),
        "conv3_up": pg.conv(1, 1, 512 + 256, 256),
        "conv2_up": pg.conv(1, 1, 256 + 64, 64),
        "conv1_up": pg.conv(1, 1, 64 + 64, 1),   # URes n_channels=1
    }
    p["ures"] = u
    return p


# -------------------------------- forward ------------------------------------

def bottleneck_forward(x, p, stride):
    identity = x
    out = conv_bn(x, p["conv1"]["w"], p["bn1"]["gamma"], p["bn1"]["beta"],
                  act="relu")
    out = conv_bn(out, p["conv2"]["w"], p["bn2"]["gamma"], p["bn2"]["beta"],
                  stride=stride, padding=1, act="relu")
    if "down_conv" in p:
        identity = conv_bn(x, p["down_conv"]["w"], p["down_bn"]["gamma"],
                           p["down_bn"]["beta"], stride=stride, act="none")
    # conv3 -> bn3 -> += identity -> relu, all fused in one matmul epilogue.
    out = conv_bn(out, p["conv3"]["w"], p["bn3"]["gamma"], p["bn3"]["beta"],
                  act="relu", residual=identity)
    return out


def ures_forward(x, p):
    original = conv2d(x, p["oc1"]["w"], p["oc1"]["b"], act="selu")
    original = conv2d(original, p["oc2"]["w"], p["oc2"]["b"], act="selu")

    l1 = conv_bn(x, p["rconv1"]["w"], p["rbn1"]["gamma"], p["rbn1"]["beta"],
                 stride=2, padding=3, act="relu")

    l2 = maxpool_3x3_s2_p1(l1)
    for bp in p["rlayer1"]:
        l2 = bottleneck_forward(l2, bp, stride=1)
    l3 = l2
    for bi, bp in enumerate(p["rlayer2"]):
        l3 = bottleneck_forward(l3, bp, stride=2 if bi == 0 else 1)
    l4 = l3
    for bi, bp in enumerate(p["rlayer3"]):
        l4 = bottleneck_forward(l4, bp, stride=2 if bi == 0 else 1)
    l5 = l4
    for bi, bp in enumerate(p["rlayer4"]):
        l5 = bottleneck_forward(l5, bp, stride=2 if bi == 0 else 1)

    l5 = conv2d(l5, p["layer5_up"]["w"], p["layer5_up"]["b"])
    xx = upsample2x_bilinear(l5)
    l4u = conv2d(l4, p["layer4_up"]["w"], p["layer4_up"]["b"], act="selu")
    xx = jnp.concatenate([xx, l4u], axis=-1)
    xx = conv2d(xx, p["conv5_up"]["w"], p["conv5_up"]["b"], act="selu")

    xx = upsample2x_bilinear(xx)
    l3u = conv2d(l3, p["layer3_up"]["w"], p["layer3_up"]["b"], act="selu")
    xx = jnp.concatenate([xx, l3u], axis=-1)
    xx = conv2d(xx, p["conv4_up"]["w"], p["conv4_up"]["b"], act="selu")

    xx = upsample2x_bilinear(xx)
    l2u = conv2d(l2, p["layer2_up"]["w"], p["layer2_up"]["b"], act="selu")
    xx = jnp.concatenate([xx, l2u], axis=-1)
    xx = conv2d(xx, p["conv3_up"]["w"], p["conv3_up"]["b"], act="selu")

    xx = upsample2x_bilinear(xx)
    l1u = conv2d(l1, p["layer1_up"]["w"], p["layer1_up"]["b"], act="selu")
    xx = jnp.concatenate([xx, l1u], axis=-1)
    xx = conv2d(xx, p["conv2_up"]["w"], p["conv2_up"]["b"], act="selu")

    xx = upsample2x_bilinear(xx)
    xx = jnp.concatenate([xx, original], axis=-1)
    xx = conv2d(xx, p["conv1_up"]["w"], p["conv1_up"]["b"], act="none",
                out_dtype=jnp.float32)
    return xx


def lanes_segnet_forward(x, p):
    # base
    x = conv2d(x, p["base_conv1"]["w"], p["base_conv1"]["b"],
               stride=2, act="selu")
    x = conv2d(x, p["base_conv2"]["w"], p["base_conv2"]["b"], act="selu")
    # deconv
    x = upsample2x_bilinear(x)
    x = conv2d(x, p["de_conv1"]["w"], p["de_conv1"]["b"], stride=2, act="selu")
    x = upsample2x_bilinear(x)
    x = conv2d(x, p["de_conv2"]["w"], p["de_conv2"]["b"], act="selu")
    x = conv2d(x, p["de_conv3"]["w"], p["de_conv3"]["b"], act="selu")
    # u_net
    return ures_forward(x, p["ures"])


if __name__ == "__main__":
    key = jax.random.PRNGKey(0)
    pkey, xkey = jax.random.split(key)
    params = make_lanes_segnet_params(pkey)

    # NCHW input (like PyTorch), converted to NHWC for the kernels.
    x_nchw = jax.random.normal(xkey, (2, 3, 32, 32), jnp.float32)
    x = jnp.transpose(x_nchw, (0, 2, 3, 1))

    forward = jax.jit(lanes_segnet_forward)
    y = forward(x, params)
    y_nchw = jnp.transpose(y, (0, 3, 1, 2))  # back to NCHW
    jax.block_until_ready(y_nchw)

    assert y_nchw.shape == (2, 1, 32, 32), y_nchw.shape
    assert bool(jnp.all(jnp.isfinite(y_nchw)))
    print("KERNEL_OK")
</pallas_src>

<mosaic_0001>
module attributes {stable_mosaic.version = 11 : i64} {
  func.func @_mm_bias_kernel(%arg0: i32, %arg1: i32, %arg2: memref<256x12xbf16, #tpu.memory_space<vmem>>, %arg3: memref<12x128xbf16, #tpu.memory_space<vmem>>, %arg4: memref<1x128xf32, #tpu.memory_space<vmem>>, %arg5: memref<256x128xbf16, #tpu.memory_space<vmem>>) attributes {dimension_semantics = [#tpu.dimension_semantics<parallel>, #tpu.dimension_semantics<parallel>], iteration_bounds = array<i64: 2, 1>, scalar_prefetch = 0 : i64, scratch_operands = 0 : i64, tpu.core_type = #tpu.core_type<tc>, window_params = [{transform_indices = @transform_0, window_bounds = array<i64: 256, 12>}, {transform_indices = @transform_1, window_bounds = array<i64: 12, 128>}, {transform_indices = @transform_2, window_bounds = array<i64: 1, 128>}, {transform_indices = @transform_3, window_bounds = array<i64: 256, 128>}]} {
    %c0 = arith.constant 0 : index
    %c0_0 = arith.constant 0 : index
    %0 = vector.load %arg2[%c0, %c0_0] : memref<256x12xbf16, #tpu.memory_space<vmem>>, vector<256x12xbf16>
    %c0_1 = arith.constant 0 : index
    %c0_2 = arith.constant 0 : index
    %1 = vector.load %arg3[%c0_1, %c0_2] : memref<12x128xbf16, #tpu.memory_space<vmem>>, vector<12x128xbf16>
    %cst = arith.constant dense<0.000000e+00> : vector<256x128xf32>
    %2 = tpu.matmul %0, %1, %cst {dimension_numbers = #tpu.dot_dimension_numbers<[1], [0], [0], [1], [0, 0, 1, 1], [], []>} : vector<256x12xbf16>, vector<12x128xbf16>, vector<256x128xf32> -> vector<256x128xf32>
    %c0_3 = arith.constant 0 : index
    %c0_4 = arith.constant 0 : index
    %3 = vector.load %arg4[%c0_3, %c0_4] : memref<1x128xf32, #tpu.memory_space<vmem>>, vector<1x128xf32>
    %4 = vector.broadcast %3 : vector<1x128xf32> to vector<256x128xf32>
    %5 = arith.addf %2, %4 : vector<256x128xf32>
    %cst_5 = arith.constant 0.000000e+00 : f32
    %6 = vector.broadcast %cst_5 : f32 to vector<256x128xf32>
    %7 = arith.minimumf %5, %6 : vector<256x128xf32>
    %8 = math.exp %7 : vector<256x128xf32>
    %cst_6 = arith.constant 1.000000e+00 : f32
    %9 = vector.broadcast %cst_6 : f32 to vector<256x128xf32>
    %10 = arith.subf %8, %9 : vector<256x128xf32>
    %cst_7 = arith.constant 1.67326319 : f32
    %11 = vector.broadcast %cst_7 : f32 to vector<256x128xf32>
    %12 = arith.mulf %11, %10 : vector<256x128xf32>
    %cst_8 = arith.constant 0.000000e+00 : f32
    %13 = vector.broadcast %cst_8 : f32 to vector<256x128xf32>
    %14 = arith.cmpf ogt, %5, %13 : vector<256x128xf32>
    %15 = arith.select %14, %5, %12 : vector<256x128xi1>, vector<256x128xf32>
    %cst_9 = arith.constant 1.05070102 : f32
    %16 = vector.broadcast %cst_9 : f32 to vector<256x128xf32>
    %17 = arith.mulf %16, %15 : vector<256x128xf32>
    %18 = arith.truncf %17 : vector<256x128xf32> to vector<256x128xbf16>
    %c0_10 = arith.constant 0 : index
    %c0_11 = arith.constant 0 : index
    %19 = vector.load %arg5[%c0_10, %c0_11] : memref<256x128xbf16, #tpu.memory_space<vmem>>, vector<256x128xbf16>
    tpu.vector_store %arg5[%c0_10, %c0_11], %18 {strides = array<i32>} : memref<256x128xbf16, #tpu.memory_space<vmem>>, vector<256x128xbf16>,
    return
  }
  func.func @transform_0(%arg0: i32, %arg1: i32) -> (i32, i32) {
    %c0_i32 = arith.constant 0 : i32
    %c0_i32_0 = arith.constant 0 : i32
    return %arg0, %c0_i32 : i32, i32
  }
  func.func @transform_1(%arg0: i32, %arg1: i32) -> (i32, i32) {
    %c0_i32 = arith.constant 0 : i32
    %c0_i32_0 = arith.constant 0 : i32
    return %c0_i32, %arg1 : i32, i32
  }
  func.func @transform_2(%arg0: i32, %arg1: i32) -> (i32, i32) {
    %c0_i32 = arith.constant 0 : i32
    %c0_i32_0 = arith.constant 0 : i32
    return %c0_i32, %arg1 : i32, i32
  }
  func.func @transform_3(%arg0: i32, %arg1: i32) -> (i32, i32) {
    %c0_i32 = arith.constant 0 : i32
    return %arg0, %arg1 : i32, i32
  }
}

</mosaic_0001>

<llo_original>
// kernel: matmul_bias_act.1
$region0: #{matmul_bias_act.1}
  #allocation0 [shape = 'u32[]', space=smem, size = 0x4, offset = 0x4, fixed_abs, tag = 'smem constant byte address 0x4 - core index']
  #allocation1 [shape = 'u32[144,128]{1,0:T(1,128)}', space=vmem, size = 0x12000, scoped, tag = 'internal scratch']
  %s0 = inlined_call_operand.vmem [shape: bf16[512,12], index: 0, kind: input, shape index: {}]
  %s1 = inlined_call_operand.vmem [shape: bf16[12,128], index: 1, kind: input, shape index: {}]
  %s2 = inlined_call_operand.vmem [shape: f32[1,128], index: 2, kind: input, shape index: {}]
  %s3 = inlined_call_operand.vmem [shape: bf16[512,128], index: 3, kind: output, shape index: {}]
  %s4 = sld [smem:[#allocation0]]
  $region45: #{matmul_bias_act.1} parent=0
    _
  %s6 = ssub.s32 1, %s4
  %s7 = scalar_select 0, %s6, %s4
  loop: start=0, step=1, limit=4
  $region2: #{matmul_bias_act.1} parent=0 // loop_pre_header
    _
  $region3: #{matmul_bias_act.1} parent=0 // loop_header
    %s9 = sphi 0, %s13
    %p10 = scmp.ge.s32.totalorder %s9, 4
    %s16 = sphi 0, %s28
    %s17 = sphi 0, %s24
    %s18 = sphi 0, %s16
    %s19 = sphi 0, %s17
    %s20 = sphi 0, %s18
    %s21 = sphi 0, %s19
    %s31 = sphi 0, %s33
    %s34 = sphi 0, %s31
    %s35 = sphi 0, %s34
    %s51 = sphi 0, %s35
    %s57 = sphi 0, %s59
    %s60 = sphi 0, %s57
    %s61 = sphi 0, %s60
    %s77 = sphi 0, %s61
    %s83 = sphi 0, %s85
    %s86 = sphi 0, %s83
    %s87 = sphi 0, %s86
    %s103 = sphi 0, %s87
    %s111 = sphi 0, %s113
    %s114 = sphi 0, %s111
    %s115 = sphi 0, %s114
    %s131 = sphi 0, %s115
  $region4: #{matmul_bias_act.1} parent=0 // loop_header_branch
    %12 = sbr.rel (%p10) target = $region8
  $region5: #{matmul_bias_act.1} parent=0 // loop_body
    %s14 = ssub.s32 %s9, 1
    %s15 = ssub.s32 %s9, 2
    %s22 = sadd.s32 1, %s17
    %p23 = scmp.ge.s32.totalorder %s22, 1
    %s24 = scalar_select %p23, 0, %s22
    %s25 = sadd.s32 1, %s16
    %s26 = scalar_select %p23, %s25, %s16
    %p27 = scmp.ge.s32.totalorder %s26, 2
    %s28 = scalar_select %p27, 0, %s26
    %s29 = ssub.s32 %s16, %s28
    %p30 = scmp.eq.s32.totalorder %s29, 0
    %s32 = sadd.s32 %s31, 1
    %s33 = scalar_select %p30, %s31, %s32
    %p36 = pneg %p30
    %p37 = scmp.eq.s32.totalorder %s9, 1
    %p38 = por %p36, %p37
    %p39 = scmp.ne.s32.totalorder %s31, %s34
    %p40 = scmp.eq.s32.totalorder %s9, 0
    %p41 = por %p39, %p40
    %p42 = scmp.ne.s32.totalorder %s31, %s34
    %p43 = scmp.eq.s32.totalorder %s14, 1
    %p44 = por %p42, %p43
    %p45 = scmp.ne.s32.totalorder %s34, %s35
    %p46 = scmp.eq.s32.totalorder %s14, 0
    %p47 = por %p45, %p46
    %p48 = scmp.ne.s32.totalorder %s34, %s35
    %p49 = scmp.eq.s32.totalorder %s15, 1
    %p50 = por %p48, %p49
    %p52 = scmp.ne.s32.totalorder %s35, %s51
    %p53 = scmp.eq.s32.totalorder %s15, 0
    %p54 = por %p52, %p53
    %s55 = ssub.s32 %s17, %s24
    %p56 = scmp.eq.s32.totalorder %s55, 0
    %s58 = sadd.s32 %s57, 1
    %s59 = scalar_select %p56, %s57, %s58
    %p62 = pneg %p56
    %p63 = scmp.eq.s32.totalorder %s9, 1
    %p64 = por %p62, %p63
    %p65 = scmp.ne.s32.totalorder %s57, %s60
    %p66 = scmp.eq.s32.totalorder %s9, 0
    %p67 = por %p65, %p66
    %p68 = scmp.ne.s32.totalorder %s57, %s60
    %p69 = scmp.eq.s32.totalorder %s14, 1
    %p70 = por %p68, %p69
    %p71 = scmp.ne.s32.totalorder %s60, %s61
    %p72 = scmp.eq.s32.totalorder %s14, 0
    %p73 = por %p71, %p72
    %p74 = scmp.ne.s32.totalorder %s60, %s61
    %p75 = scmp.eq.s32.totalorder %s15, 1
    %p76 = por %p74, %p75
    %p78 = scmp.ne.s32.totalorder %s61, %s77
    %p79 = scmp.eq.s32.totalorder %s15, 0
    %p80 = por %p78, %p79
    %s81 = ssub.s32 %s17, %s24
    %p82 = scmp.eq.s32.totalorder %s81, 0
    %s84 = sadd.s32 %s83, 1
    %s85 = scalar_select %p82, %s83, %s84
    %p88 = pneg %p82
    %p89 = scmp.eq.s32.totalorder %s9, 1
    %p90 = por %p88, %p89
    %p91 = scmp.ne.s32.totalorder %s83, %s86
    %p92 = scmp.eq.s32.totalorder %s9, 0
    %p93 = por %p91, %p92
    %p94 = scmp.ne.s32.totalorder %s83, %s86
    %p95 = scmp.eq.s32.totalorder %s14, 1
    %p96 = por %p94, %p95
    %p97 = scmp.ne.s32.totalorder %s86, %s87
    %p98 = scmp.eq.s32.totalorder %s14, 0
    %p99 = por %p97, %p98
    %p100 = scmp.ne.s32.totalorder %s86, %s87
    %p101 = scmp.eq.s32.totalorder %s15, 1
    %p102 = por %p100, %p101
    %p104 = scmp.ne.s32.totalorder %s87, %s103
    %p105 = scmp.eq.s32.totalorder %s15, 0
    %p106 = por %p104, %p105
    %s107 = ssub.s32 %s16, %s28
    %s108 = ssub.s32 %s17, %s24
    %s109 = sor.u32 %s107, %s108
    %p110 = scmp.eq.s32.totalorder %s109, 0
    %s112 = sadd.s32 %s111, 1
    %s113 = scalar_select %p110, %s111, %s112
    %p116 = pneg %p110
    %p117 = scmp.eq.s32.totalorder %s9, 1
    %p118 = por %p116, %p117
    %p119 = scmp.ne.s32.totalorder %s111, %s114
    %p120 = scmp.eq.s32.totalorder %s9, 0
    %p121 = por %p119, %p120
    %p122 = scmp.ne.s32.totalorder %s111, %s114
    %p123 = scmp.eq.s32.totalorder %s14, 1
    %p124 = por %p122, %p123
    %p125 = scmp.ne.s32.totalorder %s114, %s115
    %p126 = scmp.eq.s32.totalorder %s14, 0
    %p127 = por %p125, %p126
    %p128 = scmp.ne.s32.totalorder %s114, %s115
    %p129 = scmp.eq.s32.totalorder %s15, 1
    %p130 = por %p128, %p129
    %p132 = scmp.ne.s32.totalorder %s115, %s131
    %p133 = scmp.eq.s32.totalorder %s15, 0
    %p134 = por %p132, %p133
    %p135 = scmp.le.s32.totalorder 1, %s9
    %p136 = scmp.lt.s32.totalorder %s9, 3
    %p137 = pnand %p135, %p136
    %p138 = pneg %p137
    // Predicated region
    $region9: #{matmul_bias_act.1} parent=5 // pred_check
      _
    $region10: #{matmul_bias_act.1} parent=5 // pred_check_branch
      %140 = sbr.rel (%p137) target = $region12
    $region11: #{matmul_bias_act.1} parent=5 // pred_region
      %s141 = ssub.s32 %s9, 1
      // Predicated region
      $region13: #{matmul_bias_act.1} parent=11 // pred_check
        %p142 = pneg %p73
      $region14: #{matmul_bias_act.1} parent=11 // pred_check_branch
        %144 = sbr.rel (%p142) target = $region16
      $region15: #{matmul_bias_act.1} parent=11 // pred_region
        %p145 = scmp.lt.s32.totalorder %s19, 0
        %s146 = scalar_select %p145, %s19, 0
        %s147 = smul.addr %s146, 4
        %s148 = scalar_lea.vmem %s1, %s147
      $region16: #{matmul_bias_act.1} parent=11 // pred_fallthru
        _
      // Predicated region
      $region17: #{matmul_bias_act.1} parent=11 // pred_check
        %p149 = pneg %p99
      $region18: #{matmul_bias_act.1} parent=11 // pred_check_branch
        %151 = sbr.rel (%p149) target = $region20
      $region19: #{matmul_bias_act.1} parent=11 // pred_region
        %p152 = scmp.lt.s32.totalorder %s19, 0
        %s153 = scalar_select %p152, %s19, 0
        %s154 = scalar_lea.vmem %s2, %s153
      $region20: #{matmul_bias_act.1} parent=11 // pred_fallthru
        _
    $region12: #{matmul_bias_act.1} parent=5 // pred_fallthru
      _
    %p155 = scmp.lt.s32.totalorder %s9, 2
    // Predicated region
    $region21: #{matmul_bias_act.1} parent=5 // pred_check
      %p156 = pneg %p155
    $region22: #{matmul_bias_act.1} parent=5 // pred_check_branch
      %158 = sbr.rel (%p156) target = $region24
    $region23: #{matmul_bias_act.1} parent=5 // pred_region
      // Predicated region
      $region25: #{matmul_bias_act.1} parent=23 // pred_check
        %p159 = pneg %p41
      $region26: #{matmul_bias_act.1} parent=23 // pred_check_branch
        %161 = sbr.rel (%p159) target = $region28
      $region27: #{matmul_bias_act.1} parent=23 // pred_region
        %s162 = smul.u32 32, %s16
        %p163 = scmp.lt.s32.totalorder %s162, 63
        %s164 = scalar_select %p163, %s162, 63
        %s165 = smul.addr %s164, 4
        %s166 = scalar_lea.vmem %s0, %s165
        %s167 = smul.u32 32, %s16
      $region28: #{matmul_bias_act.1} parent=23 // pred_fallthru
        _
    $region24: #{matmul_bias_act.1} parent=5 // pred_fallthru
      _
    %p168 = scmp.le.s32.totalorder 1, %s9
    %p169 = scmp.lt.s32.totalorder %s9, 3
    %p170 = pnand %p168, %p169
    %p171 = pneg %p170
    // Predicated region
    $region29: #{matmul_bias_act.1} parent=5 // pred_check
      _
    $region30: #{matmul_bias_act.1} parent=5 // pred_check_branch
      %173 = sbr.rel (%p170) target = $region32
    $region31: #{matmul_bias_act.1} parent=5 // pred_region
      %s174 = ssub.s32 %s9, 1
      %s175 = smul.u32 32, %s18
      %p176 = scmp.lt.s32.totalorder %s175, 63
      %s177 = scalar_select %p176, %s175, 63
      %s178 = smul.addr %s177, 4
      %s179 = scalar_lea.vmem %s0, %s178
      %p180 = pneg %p47
      %p181 = pneg %p44
      %p182 = scmp.lt.s32.totalorder %s19, 0
      %s183 = scalar_select %p182, %s19, 0
      %s184 = smul.addr %s183, 4
      %s185 = scalar_lea.vmem %s1, %s184
      %p186 = pneg %p73
      %p187 = pneg %p70
      %p188 = scmp.lt.s32.totalorder %s19, 0
      %s189 = scalar_select %p188, %s19, 0
      %s190 = scalar_lea.vmem %s2, %s189
      %p191 = pneg %p99
      %p192 = pneg %p96
      %p193 = pneg %p127
      %p194 = pneg %p124
      %s195 = smul.u32 32, %s18
      %p196 = scmp.lt.s32.totalorder %s195, 63
      %s197 = scalar_select %p196, %s195, 63
      %p198 = scmp.lt.s32.totalorder %s19, 0
      %s199 = scalar_select %p198, %s19, 0
      %s200 = sadd.s32 %s199, %s197
      %s201 = smul.addr %s200, 4
      %s202 = scalar_lea.vmem %s3, %s201
      %s203 = smul.u32 32, %s18
      %p204 = scmp.lt.s32.totalorder %s203, 63
      %s205 = scalar_select %p204, %s203, 63
      %s206 = smul.addr %s205, 4
      %s207 = scalar_lea.vmem %s0, %s206
      %s208 = smul.u32 32, %s18
      %p209 = scmp.lt.s32.totalorder %s19, 0
      %s210 = scalar_select %p209, %s19, 0
      %s211 = smul.addr %s210, 4
      %s212 = scalar_lea.vmem %s1, %s211
      %p213 = scmp.lt.s32.totalorder %s19, 0
      %s214 = scalar_select %p213, %s19, 0
      %s215 = scalar_lea.vmem %s2, %s214
      %s216 = smul.u32 32, %s18
      %p217 = scmp.lt.s32.totalorder %s216, 63
      %s218 = scalar_select %p217, %s216, 63
      %p219 = scmp.lt.s32.totalorder %s19, 0
      %s220 = scalar_select %p219, %s19, 0
      %s221 = sadd.s32 %s220, %s218
      %s222 = smul.addr %s221, 4
      %s223 = scalar_lea.vmem %s3, %s222
      %s224 = smul.u32 32, %s18
      %v226 = vld [vmem:[%s207] sm:$0xf]
      %v227 = vld [vmem:[%s207 + $0x4] sm:$0xf]
      %v228 = vld [vmem:[%s207 + $0x8] sm:$0xf]
      %v229 = vld [vmem:[%s207 + $0xc] sm:$0xf]
      %v230 = vld [vmem:[%s207 + $0x10] sm:$0xf]
      %v231 = vld [vmem:[%s207 + $0x14] sm:$0xf]
      %v232 = vld [vmem:[%s207 + $0x18] sm:$0xf]
      %v233 = vld [vmem:[%s207 + $0x1c] sm:$0xf]
      %v234 = vld [vmem:[%s207 + $0x20] sm:$0xf]
      %v235 = vld [vmem:[%s207 + $0x24] sm:$0xf]
      %v236 = vld [vmem:[%s207 + $0x28] sm:$0xf]
      %v237 = vld [vmem:[%s207 + $0x2c] sm:$0xf]
      %v238 = vld [vmem:[%s207 + $0x30] sm:$0xf]
      %v239 = vld [vmem:[%s207 + $0x34] sm:$0xf]
      %v240 = vld [vmem:[%s207 + $0x38] sm:$0xf]
      %v241 = vld [vmem:[%s207 + $0x3c] sm:$0xf]
      %v242 = vld [vmem:[%s207 + $0x40] sm:$0xf]
      %v243 = vld [vmem:[%s207 + $0x44] sm:$0xf]
      %v244 = vld [vmem:[%s207 + $0x48] sm:$0xf]
      %v245 = vld [vmem:[%s207 + $0x4c] sm:$0xf]
      %v246 = vld [vmem:[%s207 + $0x50] sm:$0xf]
      %v247 = vld [vmem:[%s207 + $0x54] sm:$0xf]
      %v248 = vld [vmem:[%s207 + $0x58] sm:$0xf]
      %v249 = vld [vmem:[%s207 + $0x5c] sm:$0xf]
      %v250 = vld [vmem:[%s207 + $0x60] sm:$0xf]
      %v251 = vld [vmem:[%s207 + $0x64] sm:$0xf]
      %v252 = vld [vmem:[%s207 + $0x68] sm:$0xf]
      %v253 = vld [vmem:[%s207 + $0x6c] sm:$0xf]
      %v254 = vld [vmem:[%s207 + $0x70] sm:$0xf]
      %v255 = vld [vmem:[%s207 + $0x74] sm:$0xf]
      %v256 = vld [vmem:[%s207 + $0x78] sm:$0xf]
      %v257 = vld [vmem:[%s207 + $0x7c] sm:$0xf]
      %v258 = vld [vmem:[%s212] sm:$0xf]
      %v259 = vld [vmem:[%s212 + $0x4] sm:$0x3]
      %v260 = vld [vmem:[%s215] sm:$0x1]
      %v262 = vlaneseq
      %v263 = vshrl.u32 %v262, 7
      %v264 = vsub.s32 0, %v263
      %v265 = vrot.slane %v260, %v264
      %v299 = vunpack.c.l.b16 %v226
      %v300 = vunpack.c.l.b16 %v227
      %v301 = vunpack.c.l.b16 %v228
      %v302 = vunpack.c.l.b16 %v229
      %v303 = vunpack.c.l.b16 %v230
      %v304 = vunpack.c.l.b16 %v231
      %v305 = vunpack.c.l.b16 %v232
      %v306 = vunpack.c.l.b16 %v233
      %v307 = vunpack.c.l.b16 %v234
      %v308 = vunpack.c.l.b16 %v235
      %v309 = vunpack.c.l.b16 %v236
      %v310 = vunpack.c.l.b16 %v237
      %v311 = vunpack.c.l.b16 %v238
      %v312 = vunpack.c.l.b16 %v239
      %v313 = vunpack.c.l.b16 %v240
      %v314 = vunpack.c.l.b16 %v241
      %v315 = vunpack.c.l.b16 %v242
      %v316 = vunpack.c.l.b16 %v243
      %v317 = vunpack.c.l.b16 %v244
      %v318 = vunpack.c.l.b16 %v245
      %v319 = vunpack.c.l.b16 %v246
      %v320 = vunpack.c.l.b16 %v247
      %v321 = vunpack.c.l.b16 %v248
      %v322 = vunpack.c.l.b16 %v249
      %v323 = vunpack.c.l.b16 %v250
      %v324 = vunpack.c.l.b16 %v251
      %v325 = vunpack.c.l.b16 %v252
      %v326 = vunpack.c.l.b16 %v253
      %v327 = vunpack.c.l.b16 %v254
      %v328 = vunpack.c.l.b16 %v255
      %v329 = vunpack.c.l.b16 %v256
      %v330 = vunpack.c.l.b16 %v257
      %v331 = vpack.c.b16 %v300, %v299
      %v332 = vpack.c.b16 %v302, %v301
      %v333 = vpack.c.b16 %v304, %v303
      %v334 = vpack.c.b16 %v306, %v305
      %v335 = vpack.c.b16 %v308, %v307
      %v336 = vpack.c.b16 %v310, %v309
      %v337 = vpack.c.b16 %v312, %v311
      %v338 = vpack.c.b16 %v314, %v313
      %v339 = vpack.c.b16 %v316, %v315
      %v340 = vpack.c.b16 %v318, %v317
      %v341 = vpack.c.b16 %v320, %v319
      %v342 = vpack.c.b16 %v322, %v321
      %v343 = vpack.c.b16 %v324, %v323
      %v344 = vpack.c.b16 %v326, %v325
      %v345 = vpack.c.b16 %v328, %v327
      %v346 = vpack.c.b16 %v330, %v329
      %v349 = vunpack.c.l.b16 %v258
      %v350 = vunpack.c.l.b16 %v259
      %v351 = vpack.c.b16 %v350, %v349
      %vm352 = vcmask 97280
      %v354 = vsel %vm352, %v331, 0
      %v357 = vsel %vm352, %v332, 0
      %v360 = vsel %vm352, %v333, 0
      %v363 = vsel %vm352, %v334, 0
      %v366 = vsel %vm352, %v335, 0
      %v369 = vsel %vm352, %v336, 0
      %v372 = vsel %vm352, %v337, 0
      %v375 = vsel %vm352, %v338, 0
      %v378 = vsel %vm352, %v339, 0
      %v381 = vsel %vm352, %v340, 0
      %v384 = vsel %vm352, %v341, 0
      %v387 = vsel %vm352, %v342, 0
      %v390 = vsel %vm352, %v343, 0
      %v393 = vsel %vm352, %v344, 0
      %v396 = vsel %vm352, %v345, 0
      %v399 = vsel %vm352, %v346, 0
      %vm401 = vcmask 1045504
      %v403 = vsel %vm401, %v351, 0
      %405 = vmatprep.subr.bf16.mxu0 0
      %406 = vmatpush1.bf16.msra.mxu0 0
      %407 = vmatprep.subr.bf16.mxu0 0
      %408 = vmatpush1.bf16.msra.mxu0 0
      %409 = vmatprep.subr.bf16.mxu0 0
      %410 = vmatpush1.bf16.msra.mxu0 0
      %411 = vmatprep.subr.bf16.mxu0 0
      %412 = vmatpush1.bf16.msra.mxu0 0
      %413 = vmatprep.subr.bf16.mxu0 0
      %414 = vmatpush1.bf16.msra.mxu0 0
      %415 = vmatprep.subr.bf16.mxu0 0
      %416 = vmatpush1.bf16.msra.mxu0 0
      %417 = vmatprep.subr.bf16.mxu0 0
      %418 = vmatpush1.bf16.msra.mxu0 0
      %419 = vmatprep.subr.bf16.mxu0 0
      %420 = vmatpush1.bf16.msra.mxu0 %v403
      %421 = vmatprep.subr.bf16.mxu0 0
      %422 = vmatpush2.bf16.msra.mxu0 0
      %423 = vmatprep.subr.bf16.mxu0 0
      %424 = vmatpush2.bf16.msra.mxu0 0
      %425 = vmatprep.subr.bf16.mxu0 0
      %426 = vmatpush2.bf16.msra.mxu0 0
      %427 = vmatprep.subr.bf16.mxu0 0
      %428 = vmatpush2.bf16.msra.mxu0 0
      %429 = vmatprep.subr.bf16.mxu0 0
      %430 = vmatpush2.bf16.msra.mxu0 0
      %431 = vmatprep.subr.bf16.mxu0 0
      %432 = vmatpush2.bf16.msra.mxu0 0
      %433 = vmatprep.subr.bf16.mxu0 0
      %434 = vmatpush2.bf16.msra.mxu0 0
      %435 = vmatprep.subr.bf16.mxu0 0
      %436 = vmatpush2.bf16.msra.mxu0 0
      %437 = vmatprep.mubr.bf16.mxu0 0
      %438 = vmatmul.mubr.bf16.gmra.mxu0 %v354
      %v439 = vpop.f32.mrf.mxu0
      %v440 = vadd.f32 %v265, %v439
      %v441 = vpop.f32.mrf.mxu0
      %v442 = vpop.f32.mrf.mxu0
      %v443 = vadd.f32 %v265, %v442
      %v444 = vpop.f32.mrf.mxu0
      %445 = vmatprep.mubr.bf16.mxu0 0
      %446 = vmatmul.mubr.bf16.gmra.mxu0 %v357
      %v447 = vpop.f32.mrf.mxu0
      %v448 = vadd.f32 %v265, %v447
      %v449 = vpop.f32.mrf.mxu0
      %v450 = vpop.f32.mrf.mxu0
      %v451 = vadd.f32 %v265, %v450
      %v452 = vpop.f32.mrf.mxu0
      %453 = vmatprep.mubr.bf16.mxu0 0
      %454 = vmatmul.mubr.bf16.gmra.mxu0 %v360
      %v455 = vpop.f32.mrf.mxu0
      %v456 = vadd.f32 %v265, %v455
      %v457 = vpop.f32.mrf.mxu0
      %v458 = vpop.f32.mrf.mxu0
      %v459 = vadd.f32 %v265, %v458
      %v460 = vpop.f32.mrf.mxu0
      %461 = vmatprep.mubr.bf16.mxu0 0
      %462 = vmatmul.mubr.bf16.gmra.mxu0 %v363
      %v463 = vpop.f32.mrf.mxu0
      %v464 = vadd.f32 %v265, %v463
      %v465 = vpop.f32.mrf.mxu0
      %v466 = vpop.f32.mrf.mxu0
      %v467 = vadd.f32 %v265, %v466
      %v468 = vpop.f32.mrf.mxu0
      %469 = vmatprep.mubr.bf16.mxu0 0
      %470 = vmatmul.mubr.bf16.gmra.mxu0 %v366
      %v471 = vpop.f32.mrf.mxu0
      %v472 = vadd.f32 %v265, %v471
      %v473 = vpop.f32.mrf.mxu0
      %v474 = vpop.f32.mrf.mxu0
      %v475 = vadd.f32 %v265, %v474
      %v476 = vpop.f32.mrf.mxu0
      %477 = vmatprep.mubr.bf16.mxu0 0
      %478 = vmatmul.mubr.bf16.gmra.mxu0 %v369
      %v479 = vpop.f32.mrf.mxu0
      %v480 = vadd.f32 %v265, %v479
      %v481 = vpop.f32.mrf.mxu0
      %v482 = vpop.f32.mrf.mxu0
      %v483 = vadd.f32 %v265, %v482
      %v484 = vpop.f32.mrf.mxu0
      %485 = vmatprep.mubr.bf16.mxu0 0
      %486 = vmatmul.mubr.bf16.gmra.mxu0 %v372
      %v487 = vpop.f32.mrf.mxu0
      %v488 = vadd.f32 %v265, %v487
      %v489 = vpop.f32.mrf.mxu0
      %v490 = vpop.f32.mrf.mxu0
      %v491 = vadd.f32 %v265, %v490
      %v492 = vpop.f32.mrf.mxu0
      %493 = vmatprep.mubr.bf16.mxu0 0
      %494 = vmatmul.mubr.bf16.gmra.mxu0 %v375
      %v495 = vpop.f32.mrf.mxu0
      %v496 = vadd.f32 %v265, %v495
      %v497 = vpop.f32.mrf.mxu0
      %v498 = vpop.f32.mrf.mxu0
      %v499 = vadd.f32 %v265, %v498
      %v500 = vpop.f32.mrf.mxu0
      %501 = vmatprep.mubr.bf16.mxu0 0
      %502 = vmatmul.mubr.bf16.gmra.mxu0 %v378
      %v503 = vpop.f32.mrf.mxu0
      %v504 = vadd.f32 %v265, %v503
      %v505 = vpop.f32.mrf.mxu0
      %v506 = vpop.f32.mrf.mxu0
      %v507 = vadd.f32 %v265, %v506
      %v508 = vpop.f32.mrf.mxu0
      %509 = vmatprep.mubr.bf16.mxu0 0
      %510 = vmatmul.mubr.bf16.gmra.mxu0 %v381
      %v511 = vpop.f32.mrf.mxu0
      %v512 = vadd.f32 %v265, %v511
      %v513 = vpop.f32.mrf.mxu0
      %v514 = vpop.f32.mrf.mxu0
      %v515 = vadd.f32 %v265, %v514
      %v516 = vpop.f32.mrf.mxu0
      %517 = vmatprep.mubr.bf16.mxu0 0
      %518 = vmatmul.mubr.bf16.gmra.mxu0 %v384
      %v519 = vpop.f32.mrf.mxu0
      %v520 = vadd.f32 %v265, %v519
      %v521 = vpop.f32.mrf.mxu0
      %v522 = vpop.f32.mrf.mxu0
      %v523 = vadd.f32 %v265, %v522
      %v524 = vpop.f32.mrf.mxu0
      %525 = vmatprep.mubr.bf16.mxu0 0
      %526 = vmatmul.mubr.bf16.gmra.mxu0 %v387
      %v527 = vpop.f32.mrf.mxu0
      %v528 = vadd.f32 %v265, %v527
      %v529 = vpop.f32.mrf.mxu0
      %v530 = vpop.f32.mrf.mxu0
      %v531 = vadd.f32 %v265, %v530
      %v532 = vpop.f32.mrf.mxu0
      %533 = vmatprep.mubr.bf16.mxu0 0
      %534 = vmatmul.mubr.bf16.gmra.mxu0 %v390
      %v535 = vpop.f32.mrf.mxu0
      %v536 = vadd.f32 %v265, %v535
      %v537 = vpop.f32.mrf.mxu0
      %v538 = vpop.f32.mrf.mxu0
      %v539 = vadd.f32 %v265, %v538
      %v540 = vpop.f32.mrf.mxu0
      %541 = vmatprep.mubr.bf16.mxu0 0
      %542 = vmatmul.mubr.bf16.gmra.mxu0 %v393
      %v543 = vpop.f32.mrf.mxu0
      %v544 = vadd.f32 %v265, %v543
      %v545 = vpop.f32.mrf.mxu0
      %v546 = vpop.f32.mrf.mxu0
      %v547 = vadd.f32 %v265, %v546
      %v548 = vpop.f32.mrf.mxu0
      %549 = vmatprep.mubr.bf16.mxu0 0
      %550 = vmatmul.mubr.bf16.gmra.mxu0 %v396
      %v551 = vpop.f32.mrf.mxu0
      %v552 = vadd.f32 %v265, %v551
      %v553 = vpop.f32.mrf.mxu0
      %v554 = vpop.f32.mrf.mxu0
      %v555 = vadd.f32 %v265, %v554
      %v556 = vpop.f32.mrf.mxu0
      %557 = vmatprep.mubr.bf16.mxu0 0
      %558 = vmatmul.mubr.bf16.gmra.mxu0 %v399
      %v559 = vpop.f32.mrf.mxu0
      %v560 = vadd.f32 %v265, %v559
      %v561 = vpop.f32.mrf.mxu0
      %v562 = vpop.f32.mrf.mxu0
      %v563 = vadd.f32 %v265, %v562
      %v564 = vpop.f32.mrf.mxu0
      %565 = vdwg.mxu0
      %v566 = vmin.f32 %v440, 0.0
      %v567 = vmin.f32 %v443, 0.0
      %v568 = vmin.f32 %v448, 0.0
      %v569 = vmin.f32 %v451, 0.0
      %v570 = vmin.f32 %v456, 0.0
      %v571 = vmin.f32 %v459, 0.0
      %v572 = vmin.f32 %v464, 0.0
      %v573 = vmin.f32 %v467, 0.0
      %v574 = vmin.f32 %v472, 0.0
      %v575 = vmin.f32 %v475, 0.0
      %v576 = vmin.f32 %v480, 0.0
      %v577 = vmin.f32 %v483, 0.0
      %v578 = vmin.f32 %v488, 0.0
      %v579 = vmin.f32 %v491, 0.0
      %v580 = vmin.f32 %v496, 0.0
      %v581 = vmin.f32 %v499, 0.0
      %v582 = vmin.f32 %v504, 0.0
      %v583 = vmin.f32 %v507, 0.0
      %v584 = vmin.f32 %v512, 0.0
      %v585 = vmin.f32 %v515, 0.0
      %v586 = vmin.f32 %v520, 0.0
      %v587 = vmin.f32 %v523, 0.0
      %v588 = vmin.f32 %v528, 0.0
      %v589 = vmin.f32 %v531, 0.0
      %v590 = vmin.f32 %v536, 0.0
      %v591 = vmin.f32 %v539, 0.0
      %v592 = vmin.f32 %v544, 0.0
      %v593 = vmin.f32 %v547, 0.0
      %v594 = vmin.f32 %v552, 0.0
      %v595 = vmin.f32 %v555, 0.0
      %v596 = vmin.f32 %v560, 0.0
      %v597 = vmin.f32 %v563, 0.0
      %v598 = vmul.f32 %v566, 1.442695
      %v599 = vpow.pop %v598
      %v600 = vmul.f32 %v567, 1.442695
      %v601 = vpow.pop %v600
      %v602 = vmul.f32 %v568, 1.442695
      %v603 = vpow.pop %v602
      %v604 = vmul.f32 %v569, 1.442695
      %v605 = vpow.pop %v604
      %v606 = vmul.f32 %v570, 1.442695
      %v607 = vpow.pop %v606
      %v608 = vmul.f32 %v571, 1.442695
      %v609 = vpow.pop %v608
      %v610 = vmul.f32 %v572, 1.442695
      %v611 = vpow.pop %v610
      %v612 = vmul.f32 %v573, 1.442695
      %v613 = vpow.pop %v612
      %v614 = vmul.f32 %v574, 1.442695
      %v615 = vpow.pop %v614
      %v616 = vmul.f32 %v575, 1.442695
      %v617 = vpow.pop %v616
      %v618 = vmul.f32 %v576, 1.442695
      %v619 = vpow.pop %v618
      %v620 = vmul.f32 %v577, 1.442695
      %v621 = vpow.pop %v620
      %v622 = vmul.f32 %v578, 1.442695
      %v623 = vpow.pop %v622
      %v624 = vmul.f32 %v579, 1.442695
      %v625 = vpow.pop %v624
      %v626 = vmul.f32 %v580, 1.442695
      %v627 = vpow.pop %v626
      %v628 = vmul.f32 %v581, 1.442695
      %v629 = vpow.pop %v628
      %v630 = vmul.f32 %v582, 1.442695
      %v631 = vpow.pop %v630
      %v632 = vmul.f32 %v583, 1.442695
      %v633 = vpow.pop %v632
      %v634 = vmul.f32 %v584, 1.442695
      %v635 = vpow.pop %v634
      %v636 = vmul.f32 %v585, 1.442695
      %v637 = vpow.pop %v636
      %v638 = vmul.f32 %v586, 1.442695
      %v639 = vpow.pop %v638
      %v640 = vmul.f32 %v587, 1.442695
      %v641 = vpow.pop %v640
      %v642 = vmul.f32 %v588, 1.442695
      %v643 = vpow.pop %v642
      %v644 = vmul.f32 %v589, 1.442695
      %v645 = vpow.pop %v644
      %v646 = vmul.f32 %v590, 1.442695
      %v647 = vpow.pop %v646
      %v648 = vmul.f32 %v591, 1.442695
      %v649 = vpow.pop %v648
      %v650 = vmul.f32 %v592, 1.442695
      %v651 = vpow.pop %v650
      %v652 = vmul.f32 %v593, 1.442695
      %v653 = vpow.pop %v652
      %v654 = vmul.f32 %v594, 1.442695
      %v655 = vpow.pop %v654
      %v656 = vmul.f32 %v595, 1.442695
      %v657 = vpow.pop %v656
      %v658 = vmul.f32 %v596, 1.442695
      %v659 = vpow.pop %v658
      %v660 = vmul.f32 %v597, 1.442695
      %v661 = vpow.pop %v660
      %v662 = vsub.f32 %v599, 1.0
      %v663 = vsub.f32 %v601, 1.0
      %v664 = vsub.f32 %v603, 1.0
      %v665 = vsub.f32 %v605, 1.0
      %v666 = vsub.f32 %v607, 1.0
      %v667 = vsub.f32 %v609, 1.0
      %v668 = vsub.f32 %v611, 1.0
      %v669 = vsub.f32 %v613, 1.0
      %v670 = vsub.f32 %v615, 1.0
      %v671 = vsub.f32 %v617, 1.0
      %v672 = vsub.f32 %v619, 1.0
      %v673 = vsub.f32 %v621, 1.0
      %v674 = vsub.f32 %v623, 1.0
      %v675 = vsub.f32 %v625, 1.0
      %v676 = vsub.f32 %v627, 1.0
      %v677 = vsub.f32 %v629, 1.0
      %v678 = vsub.f32 %v631, 1.0
      %v679 = vsub.f32 %v633, 1.0
      %v680 = vsub.f32 %v635, 1.0
      %v681 = vsub.f32 %v637, 1.0
      %v682 = vsub.f32 %v639, 1.0
      %v683 = vsub.f32 %v641, 1.0
      %v684 = vsub.f32 %v643, 1.0
      %v685 = vsub.f32 %v645, 1.0
      %v686 = vsub.f32 %v647, 1.0
      %v687 = vsub.f32 %v649, 1.0
      %v688 = vsub.f32 %v651, 1.0
      %v689 = vsub.f32 %v653, 1.0
      %v690 = vsub.f32 %v655, 1.0
      %v691 = vsub.f32 %v657, 1.0
      %v692 = vsub.f32 %v659, 1.0
      %v693 = vsub.f32 %v661, 1.0
      %v694 = vmul.f32 %v662, 1.6732632
      %v695 = vmul.f32 %v663, 1.6732632
      %v696 = vmul.f32 %v664, 1.6732632
      %v697 = vmul.f32 %v665, 1.6732632
      %v698 = vmul.f32 %v666, 1.6732632
      %v699 = vmul.f32 %v667, 1.6732632
      %v700 = vmul.f32 %v668, 1.6732632
      %v701 = vmul.f32 %v669, 1.6732632
      %v702 = vmul.f32 %v670, 1.6732632
      %v703 = vmul.f32 %v671, 1.6732632
      %v704 = vmul.f32 %v672, 1.6732632
      %v705 = vmul.f32 %v673, 1.6732632
      %v706 = vmul.f32 %v674, 1.6732632
      %v707 = vmul.f32 %v675, 1.6732632
      %v708 = vmul.f32 %v676, 1.6732632
      %v709 = vmul.f32 %v677, 1.6732632
      %v710 = vmul.f32 %v678, 1.6732632
      %v711 = vmul.f32 %v679, 1.6732632
      %v712 = vmul.f32 %v680, 1.6732632
      %v713 = vmul.f32 %v681, 1.6732632
      %v714 = vmul.f32 %v682, 1.6732632
      %v715 = vmul.f32 %v683, 1.6732632
      %v716 = vmul.f32 %v684, 1.6732632
      %v717 = vmul.f32 %v685, 1.6732632
      %v718 = vmul.f32 %v686, 1.6732632
      %v719 = vmul.f32 %v687, 1.6732632
      %v720 = vmul.f32 %v688, 1.6732632
      %v721 = vmul.f32 %v689, 1.6732632
      %v722 = vmul.f32 %v690, 1.6732632
      %v723 = vmul.f32 %v691, 1.6732632
      %v724 = vmul.f32 %v692, 1.6732632
      %v725 = vmul.f32 %v693, 1.6732632
      %vm726 = vcmp.gt.f32.partialorder %v440, 0.0
      %vm727 = vcmp.gt.f32.partialorder %v443, 0.0
      %vm728 = vcmp.gt.f32.partialorder %v448, 0.0
      %vm729 = vcmp.gt.f32.partialorder %v451, 0.0
      %vm730 = vcmp.gt.f32.partialorder %v456, 0.0
      %vm731 = vcmp.gt.f32.partialorder %v459, 0.0
      %vm732 = vcmp.gt.f32.partialorder %v464, 0.0
      %vm733 = vcmp.gt.f32.partialorder %v467, 0.0
      %vm734 = vcmp.gt.f32.partialorder %v472, 0.0
      %vm735 = vcmp.gt.f32.partialorder %v475, 0.0
      %vm736 = vcmp.gt.f32.partialorder %v480, 0.0
      %vm737 = vcmp.gt.f32.partialorder %v483, 0.0
      %vm738 = vcmp.gt.f32.partialorder %v488, 0.0
      %vm739 = vcmp.gt.f32.partialorder %v491, 0.0
      %vm740 = vcmp.gt.f32.partialorder %v496, 0.0
      %vm741 = vcmp.gt.f32.partialorder %v499, 0.0
      %vm742 = vcmp.gt.f32.partialorder %v504, 0.0
      %vm743 = vcmp.gt.f32.partialorder %v507, 0.0
      %vm744 = vcmp.gt.f32.partialorder %v512, 0.0
      %vm745 = vcmp.gt.f32.partialorder %v515, 0.0
      %vm746 = vcmp.gt.f32.partialorder %v520, 0.0
      %vm747 = vcmp.gt.f32.partialorder %v523, 0.0
      %vm748 = vcmp.gt.f32.partialorder %v528, 0.0
      %vm749 = vcmp.gt.f32.partialorder %v531, 0.0
      %vm750 = vcmp.gt.f32.partialorder %v536, 0.0
      %vm751 = vcmp.gt.f32.partialorder %v539, 0.0
      %vm752 = vcmp.gt.f32.partialorder %v544, 0.0
      %vm753 = vcmp.gt.f32.partialorder %v547, 0.0
      %vm754 = vcmp.gt.f32.partialorder %v552, 0.0
      %vm755 = vcmp.gt.f32.partialorder %v555, 0.0
      %vm756 = vcmp.gt.f32.partialorder %v560, 0.0
      %vm757 = vcmp.gt.f32.partialorder %v563, 0.0
      %v758 = vsel %vm726, %v440, %v694
      %v759 = vsel %vm727, %v443, %v695
      %v760 = vsel %vm728, %v448, %v696
      %v761 = vsel %vm729, %v451, %v697
      %v762 = vsel %vm730, %v456, %v698
      %v763 = vsel %vm731, %v459, %v699
      %v764 = vsel %vm732, %v464, %v700
      %v765 = vsel %vm733, %v467, %v701
      %v766 = vsel %vm734, %v472, %v702
      %v767 = vsel %vm735, %v475, %v703
      %v768 = vsel %vm736, %v480, %v704
      %v769 = vsel %vm737, %v483, %v705
      %v770 = vsel %vm738, %v488, %v706
      %v771 = vsel %vm739, %v491, %v707
      %v772 = vsel %vm740, %v496, %v708
      %v773 = vsel %vm741, %v499, %v709
      %v774 = vsel %vm742, %v504, %v710
      %v775 = vsel %vm743, %v507, %v711
      %v776 = vsel %vm744, %v512, %v712
      %v777 = vsel %vm745, %v515, %v713
      %v778 = vsel %vm746, %v520, %v714
      %v779 = vsel %vm747, %v523, %v715
      %v780 = vsel %vm748, %v528, %v716
      %v781 = vsel %vm749, %v531, %v717
      %v782 = vsel %vm750, %v536, %v718
      %v783 = vsel %vm751, %v539, %v719
      %v784 = vsel %vm752, %v544, %v720
      %v785 = vsel %vm753, %v547, %v721
      %v786 = vsel %vm754, %v552, %v722
      %v787 = vsel %vm755, %v555, %v723
      %v788 = vsel %vm756, %v560, %v724
      %v789 = vsel %vm757, %v563, %v725
      %v790 = vmul.f32 %v758, 1.050701
      %v791 = vmul.f32 %v759, 1.050701
      %v792 = vmul.f32 %v760, 1.050701
      %v793 = vmul.f32 %v761, 1.050701
      %v794 = vmul.f32 %v762, 1.050701
      %v795 = vmul.f32 %v763, 1.050701
      %v796 = vmul.f32 %v764, 1.050701
      %v797 = vmul.f32 %v765, 1.050701
      %v798 = vmul.f32 %v766, 1.050701
      %v799 = vmul.f32 %v767, 1.050701
      %v800 = vmul.f32 %v768, 1.050701
      %v801 = vmul.f32 %v769, 1.050701
      %v802 = vmul.f32 %v770, 1.050701
      %v803 = vmul.f32 %v771, 1.050701
      %v804 = vmul.f32 %v772, 1.050701
      %v805 = vmul.f32 %v773, 1.050701
      %v806 = vmul.f32 %v774, 1.050701
      %v807 = vmul.f32 %v775, 1.050701
      %v808 = vmul.f32 %v776, 1.050701
      %v809 = vmul.f32 %v777, 1.050701
      %v810 = vmul.f32 %v778, 1.050701
      %v811 = vmul.f32 %v779, 1.050701
      %v812 = vmul.f32 %v780, 1.050701
      %v813 = vmul.f32 %v781, 1.050701
      %v814 = vmul.f32 %v782, 1.050701
      %v815 = vmul.f32 %v783, 1.050701
      %v816 = vmul.f32 %v784, 1.050701
      %v817 = vmul.f32 %v785, 1.050701
      %v818 = vmul.f32 %v786, 1.050701
      %v819 = vmul.f32 %v787, 1.050701
      %v820 = vmul.f32 %v788, 1.050701
      %v821 = vmul.f32 %v789, 1.050701
      %v822 = vpack.c.bf16 %v791, %v790
      %v823 = vpack.c.bf16 %v793, %v792
      %v824 = vpack.c.bf16 %v795, %v794
      %v825 = vpack.c.bf16 %v797, %v796
      %v826 = vpack.c.bf16 %v799, %v798
      %v827 = vpack.c.bf16 %v801, %v800
      %v828 = vpack.c.bf16 %v803, %v802
      %v829 = vpack.c.bf16 %v805, %v804
      %v830 = vpack.c.bf16 %v807, %v806
      %v831 = vpack.c.bf16 %v809, %v808
      %v832 = vpack.c.bf16 %v811, %v810
      %v833 = vpack.c.bf16 %v813, %v812
      %v834 = vpack.c.bf16 %v815, %v814
      %v835 = vpack.c.bf16 %v817, %v816
      %v836 = vpack.c.bf16 %v819, %v818
      %v837 = vpack.c.bf16 %v821, %v820
      %v854 = vunpack.c.l.b16 %v822
      %v855 = vunpack.c.h.b16 %v822
      %v856 = vunpack.c.l.b16 %v823
      %v857 = vunpack.c.h.b16 %v823
      %v858 = vunpack.c.l.b16 %v824
      %v859 = vunpack.c.h.b16 %v824
      %v860 = vunpack.c.l.b16 %v825
      %v861 = vunpack.c.h.b16 %v825
      %v862 = vunpack.c.l.b16 %v826
      %v863 = vunpack.c.h.b16 %v826
      %v864 = vunpack.c.l.b16 %v827
      %v865 = vunpack.c.h.b16 %v827
      %v866 = vunpack.c.l.b16 %v828
      %v867 = vunpack.c.h.b16 %v828
      %v868 = vunpack.c.l.b16 %v829
      %v869 = vunpack.c.h.b16 %v829
      %v870 = vunpack.c.l.b16 %v830
      %v871 = vunpack.c.h.b16 %v830
      %v872 = vunpack.c.l.b16 %v831
      %v873 = vunpack.c.h.b16 %v831
      %v874 = vunpack.c.l.b16 %v832
      %v875 = vunpack.c.h.b16 %v832
      %v876 = vunpack.c.l.b16 %v833
      %v877 = vunpack.c.h.b16 %v833
      %v878 = vunpack.c.l.b16 %v834
      %v879 = vunpack.c.h.b16 %v834
      %v880 = vunpack.c.l.b16 %v835
      %v881 = vunpack.c.h.b16 %v835
      %v882 = vunpack.c.l.b16 %v836
      %v883 = vunpack.c.h.b16 %v836
      %v884 = vunpack.c.l.b16 %v837
      %v885 = vunpack.c.h.b16 %v837
      %v886 = vpack.c.b16 %v854, %v854
      %v887 = vpack.c.b16 %v855, %v855
      %v888 = vpack.c.b16 %v856, %v856
      %v889 = vpack.c.b16 %v857, %v857
      %v890 = vpack.c.b16 %v858, %v858
      %v891 = vpack.c.b16 %v859, %v859
      %v892 = vpack.c.b16 %v860, %v860
      %v893 = vpack.c.b16 %v861, %v861
      %v894 = vpack.c.b16 %v862, %v862
      %v895 = vpack.c.b16 %v863, %v863
      %v896 = vpack.c.b16 %v864, %v864
      %v897 = vpack.c.b16 %v865, %v865
      %v898 = vpack.c.b16 %v866, %v866
      %v899 = vpack.c.b16 %v867, %v867
      %v900 = vpack.c.b16 %v868, %v868
      %v901 = vpack.c.b16 %v869, %v869
      %v902 = vpack.c.b16 %v870, %v870
      %v903 = vpack.c.b16 %v871, %v871
      %v904 = vpack.c.b16 %v872, %v872
      %v905 = vpack.c.b16 %v873, %v873
      %v906 = vpack.c.b16 %v874, %v874
      %v907 = vpack.c.b16 %v875, %v875
      %v908 = vpack.c.b16 %v876, %v876
      %v909 = vpack.c.b16 %v877, %v877
      %v910 = vpack.c.b16 %v878, %v878
      %v911 = vpack.c.b16 %v879, %v879
      %v912 = vpack.c.b16 %v880, %v880
      %v913 = vpack.c.b16 %v881, %v881
      %v914 = vpack.c.b16 %v882, %v882
      %v915 = vpack.c.b16 %v883, %v883
      %v916 = vpack.c.b16 %v884, %v884
      %v917 = vpack.c.b16 %v885, %v885
      %950 = vst [vmem:[%s223] sm:$0xf] %v886
      %951 = vst [vmem:[%s223 + $0x4] sm:$0xf] %v887
      %952 = vst [vmem:[%s223 + $0x8] sm:$0xf] %v888
      %953 = vst [vmem:[%s223 + $0xc] sm:$0xf] %v889
      %954 = vst [vmem:[%s223 + $0x10] sm:$0xf] %v890
      %955 = vst [vmem:[%s223 + $0x14] sm:$0xf] %v891
      %956 = vst [vmem:[%s223 + $0x18] sm:$0xf] %v892
      %957 = vst [vmem:[%s223 + $0x1c] sm:$0xf] %v893
      %958 = vst [vmem:[%s223 + $0x20] sm:$0xf] %v894
      %959 = vst [vmem:[%s223 + $0x24] sm:$0xf] %v895
      %960 = vst [vmem:[%s223 + $0x28] sm:$0xf] %v896
      %961 = vst [vmem:[%s223 + $0x2c] sm:$0xf] %v897
      %962 = vst [vmem:[%s223 + $0x30] sm:$0xf] %v898
      %963 = vst [vmem:[%s223 + $0x34] sm:$0xf] %v899
      %964 = vst [vmem:[%s223 + $0x38] sm:$0xf] %v900
      %965 = vst [vmem:[%s223 + $0x3c] sm:$0xf] %v901
      %966 = vst [vmem:[%s223 + $0x40] sm:$0xf] %v902
      %967 = vst [vmem:[%s223 + $0x44] sm:$0xf] %v903
      %968 = vst [vmem:[%s223 + $0x48] sm:$0xf] %v904
      %969 = vst [vmem:[%s223 + $0x4c] sm:$0xf] %v905
      %970 = vst [vmem:[%s223 + $0x50] sm:$0xf] %v906
      %971 = vst [vmem:[%s223 + $0x54] sm:$0xf] %v907
      %972 = vst [vmem:[%s223 + $0x58] sm:$0xf] %v908
      %973 = vst [vmem:[%s223 + $0x5c] sm:$0xf] %v909
      %974 = vst [vmem:[%s223 + $0x60] sm:$0xf] %v910
      %975 = vst [vmem:[%s223 + $0x64] sm:$0xf] %v911
      %976 = vst [vmem:[%s223 + $0x68] sm:$0xf] %v912
      %977 = vst [vmem:[%s223 + $0x6c] sm:$0xf] %v913
      %978 = vst [vmem:[%s223 + $0x70] sm:$0xf] %v914
      %979 = vst [vmem:[%s223 + $0x74] sm:$0xf] %v915
      %980 = vst [vmem:[%s223 + $0x78] sm:$0xf] %v916
      %981 = vst [vmem:[%s223 + $0x7c] sm:$0xf] %v917
      %s982 = smul.u32 32, %s18
      %p983 = scmp.lt.s32.totalorder %s982, 63
      %s984 = scalar_select %p983, %s982, 63
      %p985 = scmp.lt.s32.totalorder %s19, 0
      %s986 = scalar_select %p985, %s19, 0
      %s987 = sadd.s32 %s986, %s984
      %s988 = smul.addr %s987, 4
      %s989 = scalar_lea.vmem %s3, %s988
      // Predicated region
      $region33: #{matmul_bias_act.1} parent=31 // pred_check
        %p990 = pneg %p124
      $region34: #{matmul_bias_act.1} parent=31 // pred_check_branch
        %992 = sbr.rel (%p990) target = $region36
      $region35: #{matmul_bias_act.1} parent=31 // pred_region
        %s993 = smul.u32 32, %s18
      $region36: #{matmul_bias_act.1} parent=31 // pred_fallthru
        _
    $region32: #{matmul_bias_act.1} parent=5 // pred_fallthru
      _
    %p994 = scmp.le.s32.totalorder 2, %s9
    // Predicated region
    $region37: #{matmul_bias_act.1} parent=5 // pred_check
      %p995 = pneg %p994
    $region38: #{matmul_bias_act.1} parent=5 // pred_check_branch
      %997 = sbr.rel (%p995) target = $region40
    $region39: #{matmul_bias_act.1} parent=5 // pred_region
      %s998 = ssub.s32 %s9, 2
      // Predicated region
      $region41: #{matmul_bias_act.1} parent=39 // pred_check
        %p999 = pneg %p130
      $region42: #{matmul_bias_act.1} parent=39 // pred_check_branch
        %1001 = sbr.rel (%p999) target = $region44
      $region43: #{matmul_bias_act.1} parent=39 // pred_region
        %s1002 = smul.u32 32, %s20
        %p1003 = scmp.lt.s32.totalorder %s1002, 63
        %s1004 = scalar_select %p1003, %s1002, 63
        %p1005 = scmp.lt.s32.totalorder %s21, 0
        %s1006 = scalar_select %p1005, %s21, 0
        %s1007 = sadd.s32 %s1006, %s1004
        %s1008 = smul.addr %s1007, 4
        %s1009 = scalar_lea.vmem %s3, %s1008
      $region44: #{matmul_bias_act.1} parent=39 // pred_fallthru
        _
    $region40: #{matmul_bias_act.1} parent=5 // pred_fallthru
      _
  $region6: #{matmul_bias_act.1} parent=0 // loop_footer
    %s13 = sadd.s32 1, %s9
  $region7: #{matmul_bias_act.1} parent=0 // loop_footer_branch
    %8 = sbr.rel target = $region3
  $region8: #{matmul_bias_act.1} parent=0 // loop_exit
    _

</llo_original>
